<compile_context>
chip_gen: v5e
topology: v5e:2x2
jax: 0.10.0
libtpu: 0.0.40
codegen_flags: <defaults>
</compile_context>

<pallas_src>
import functools

import jax
import jax.numpy as jnp
import numpy as np
from jax.experimental import pallas as pl
from jax.experimental.pallas import tpu as pltpu


def _round_up(x, m):
    return (x + m - 1) // m * m


def _msg_kernel(
    msg_in_ref,   # [TE, K]  gathered features | edge_attr | edge_time_emb (f32)
    w_msg_ref,    # [K, D]   fused msg_function weight
    b_msg_ref,    # [1, D]   msg_function bias
    msg_ref,      # [TE, D]  output: relu(msg_in @ W + b), bf16
):
    out = jnp.dot(msg_in_ref[...], w_msg_ref[...],
                  preferred_element_type=jnp.float32) + b_msg_ref[...]
    msg_ref[...] = jnp.maximum(out, 0.0).astype(msg_ref.dtype)


def _scatter_kernel(
    msg_ref,      # [TE, D]  bf16 edge messages
    dst_ref,      # [1, TE]  int32 destination node index per edge (-1 = padding)
    bound_ref,    # [TN, D]  boundary condition tile (f32)
    w_lin_ref,    # [D, D]   linear weight
    vecs_ref,     # [3, D]   rows: lin bias, ln gamma, ln beta
    out_ref,      # [TN, D]  output tile
    acc_ref,      # [TN, D]  f32 scratch accumulator (scatter result)
):
    i = pl.program_id(0)                      # node-tile index   (parallel)
    j = pl.program_id(1)                      # edge-tile index   (reduction)
    TN = acc_ref.shape[0]
    TE = dst_ref.shape[1]

    # ---- init accumulator with the boundary condition (scatter init value) ----
    @pl.when(j == 0)
    def _init():
        acc_ref[...] = bound_ref[...]

    # ---- scatter-sum by destination: bf16 one-hot matmul on the MXU ----
    row_ids = i * TN + jax.lax.broadcasted_iota(jnp.int32, (TN, TE), 0)
    onehot = (row_ids == dst_ref[...]).astype(jnp.bfloat16)         # [TN, TE]
    acc_ref[...] += jnp.dot(onehot, msg_ref[...],
                            preferred_element_type=jnp.float32)     # [TN, D]

    # ---- epilogue: Linear -> LayerNorm -> ReLU (dropout identity in eval) ----
    @pl.when(j == pl.num_programs(1) - 1)
    def _finalize():
        out = jnp.dot(acc_ref[...], w_lin_ref[...],
                      preferred_element_type=jnp.float32) + vecs_ref[0:1, :]
        mean = jnp.mean(out, axis=-1, keepdims=True)
        var = jnp.mean((out - mean) ** 2, axis=-1, keepdims=True)
        normed = (out - mean) * jax.lax.rsqrt(var + 1e-5)
        normed = normed * vecs_ref[1:2, :] + vecs_ref[2:3, :]
        out_ref[...] = jnp.maximum(normed, 0.0).astype(out_ref.dtype)


def init_tsar_params(key, emb_dim, edge_attr_size, edge_time_emb_size):
    """Deterministic synthetic parameters (same shapes as the nn.Module)."""
    k1, k2, k3, k4, k5 = jax.random.split(key, 5)
    in_dim = emb_dim + edge_attr_size + edge_time_emb_size
    scale_msg = 1.0 / jnp.sqrt(in_dim)
    scale_lin = 1.0 / jnp.sqrt(emb_dim)
    return {
        # stored as [in, out] (transposed relative to torch's [out, in])
        "msg_w": jax.random.uniform(k1, (in_dim, emb_dim), jnp.float32,
                                    -scale_msg, scale_msg),
        "msg_b": jax.random.uniform(k2, (emb_dim,), jnp.float32,
                                    -scale_msg, scale_msg),
        "lin_w": jax.random.uniform(k3, (emb_dim, emb_dim), jnp.float32,
                                    -scale_lin, scale_lin),
        "lin_b": jax.random.uniform(k4, (emb_dim,), jnp.float32,
                                    -scale_lin, scale_lin),
        "ln_g": jnp.ones((emb_dim,), jnp.float32),
        "ln_b": jnp.zeros((emb_dim,), jnp.float32),
        # present in the module but unused by forward()
        "layer_relation_embedding": jax.random.uniform(k5, (emb_dim,), jnp.float32),
    }


@functools.partial(jax.jit, static_argnames=("edge_tile", "node_tile"))
def tsar_layer_forward(params, feature_view, edge_index, edge_attr,
                       edge_time_emb, boundary_condition,
                       *, edge_tile=1024, node_tile=512):
    N, D = feature_view.shape
    E = edge_index.shape[1]
    A = edge_attr.shape[1]
    T = edge_time_emb.shape[1]
    K = D + A + T

    src = edge_index[0].astype(jnp.int32)
    dst = edge_index[1].astype(jnp.int32)

    # Real row gather (exact, f32) + fused concat -> one [E, K] matmul input.
    gathered = jnp.take(feature_view.astype(jnp.float32), src, axis=0)
    msg_in = jnp.concatenate(
        [gathered, edge_attr.astype(jnp.float32), edge_time_emb.astype(jnp.float32)],
        axis=1)

    # Tile sizes: edge tile multiple of 128 (lane-aligned dst row), node tile
    # multiple of 8.  Defaults sized well inside a 32 MiB scoped-VMEM budget
    # (safe on v5e/v6e 128 MiB and v7x 64 MiB with double buffering).
    TE = min(edge_tile, _round_up(E, 128))
    TE = _round_up(TE, 128)
    TN = min(node_tile, _round_up(N, 8))
    TN = _round_up(TN, 8)
    E_pad = _round_up(E, TE)
    N_pad = _round_up(N, TN)

    msg_in = jnp.pad(msg_in, ((0, E_pad - E), (0, 0)))
    msg_b = params["msg_b"].reshape(1, D)

    # ---- Phase 1: edge messages, computed exactly once per edge (bf16 out) ----
    msg = pl.pallas_call(
        _msg_kernel,
        out_shape=jax.ShapeDtypeStruct((E_pad, D), jnp.bfloat16),
        grid=(E_pad // TE,),
        in_specs=[
            pl.BlockSpec((TE, K), lambda e: (e, 0)),        # msg_in (edge tiles)
            pl.BlockSpec((K, D), lambda e: (0, 0)),         # fused msg weight
            pl.BlockSpec((1, D), lambda e: (0, 0)),         # msg bias
        ],
        out_specs=pl.BlockSpec((TE, D), lambda e: (e, 0)),
        compiler_params=pltpu.CompilerParams(
            dimension_semantics=("parallel",),
            vmem_limit_bytes=32 * 1024 * 1024),
    )(msg_in, params["msg_w"], msg_b)

    # ---- Phase 2: scatter-sum + Linear + LayerNorm + ReLU ----
    dst_row = jnp.pad(dst, (0, E_pad - E), constant_values=-1).reshape(1, E_pad)
    boundary = jnp.pad(boundary_condition.astype(jnp.float32),
                       ((0, N_pad - N), (0, 0)))

    # Pack all [D]-vectors into one VMEM tile (one DMA instead of three).
    vecs = jnp.stack([params["lin_b"], params["ln_g"], params["ln_b"]], axis=0)

    grid = (N_pad // TN, E_pad // TE)

    out = pl.pallas_call(
        _scatter_kernel,
        out_shape=jax.ShapeDtypeStruct((N_pad, D), jnp.float32),
        grid=grid,
        in_specs=[
            pl.BlockSpec((TE, D), lambda i, j: (j, 0)),     # msg    (edge tiles, bf16)
            pl.BlockSpec((1, TE), lambda i, j: (0, j)),     # dst    (edge tiles)
            pl.BlockSpec((TN, D), lambda i, j: (i, 0)),     # boundary (node tiles)
            pl.BlockSpec((D, D), lambda i, j: (0, 0)),      # linear weight
            pl.BlockSpec((3, D), lambda i, j: (0, 0)),      # packed bias/LN vectors
        ],
        out_specs=pl.BlockSpec((TN, D), lambda i, j: (i, 0)),
        scratch_shapes=[pltpu.VMEM((TN, D), jnp.float32)],
        input_output_aliases={2: 0},                        # boundary -> output buf
        compiler_params=pltpu.CompilerParams(
            dimension_semantics=("parallel", "arbitrary"),
            vmem_limit_bytes=32 * 1024 * 1024),
    )(msg, dst_row, boundary, params["lin_w"], vecs)

    return out[:N]


def _tsar_reference(params, feature_view, edge_index, edge_attr,
                    edge_time_emb, boundary_condition):
    """Pure-JAX reference (same interpretation of the boundary condition)."""
    src = edge_index[0]
    dst = edge_index[1]
    msg = jnp.concatenate([feature_view[src], edge_attr, edge_time_emb], axis=1)
    msg = jax.nn.relu(msg @ params["msg_w"] + params["msg_b"])
    agg = jnp.zeros_like(boundary_condition).at[dst].add(msg) + boundary_condition
    out = agg @ params["lin_w"] + params["lin_b"]
    mean = out.mean(-1, keepdims=True)
    var = ((out - mean) ** 2).mean(-1, keepdims=True)
    out = (out - mean) * jax.lax.rsqrt(var + 1e-5) * params["ln_g"] + params["ln_b"]
    return jax.nn.relu(out)


if __name__ == "__main__":
    # Small deterministic example shapes consistent with the module's forward().
    N = 16          # num_nodes
    E = 32          # num_edges
    D = 32          # emb_dim
    A = 8           # edge_attr_size
    T = 8           # edge_time_emb_size

    root = jax.random.PRNGKey(0)
    kp, kf, ke, ka, kt, kb = jax.random.split(root, 6)

    params = init_tsar_params(kp, D, A, T)

    feature_view = jax.random.normal(kf, (N, D), jnp.float32)
    edge_index = jax.random.randint(ke, (2, E), 0, N, jnp.int32)
    edge_attr = jax.random.normal(ka, (E, A), jnp.float32)
    edge_time_emb = jax.random.normal(kt, (E, T), jnp.float32)
    boundary_condition = jax.random.normal(kb, (N, D), jnp.float32)

    out = tsar_layer_forward(params, feature_view, edge_index, edge_attr,
                             edge_time_emb, boundary_condition)
    out = jax.block_until_ready(out)
    assert out.shape == (N, D) and out.dtype == jnp.float32

    ref = _tsar_reference(params, feature_view, edge_index, edge_attr,
                          edge_time_emb, boundary_condition)
    # Loose tolerance: scatter matmul runs with bf16 inputs (f32 accumulation).
    np.testing.assert_allclose(np.asarray(out), np.asarray(ref),
                               atol=5e-2, rtol=5e-2)
    print("KERNEL_OK")
</pallas_src>

<mosaic_0001>
module attributes {stable_mosaic.version = 11 : i64} {
  func.func @_msg_kernel(%arg0: i32, %arg1: memref<128x48xf32, #tpu.memory_space<vmem>>, %arg2: memref<48x32xf32, #tpu.memory_space<vmem>>, %arg3: memref<1x32xf32, #tpu.memory_space<vmem>>, %arg4: memref<128x32xbf16, #tpu.memory_space<vmem>>) attributes {dimension_semantics = [#tpu.dimension_semantics<parallel>], iteration_bounds = array<i64: 1>, scalar_prefetch = 0 : i64, scratch_operands = 0 : i64, tpu.core_type = #tpu.core_type<tc>, window_params = [{transform_indices = @transform_0, window_bounds = array<i64: 128, 48>}, {pipeline_mode = #tpu.pipeline_mode<synchronous>, transform_indices = @transform_1, window_bounds = array<i64: 48, 32>}, {pipeline_mode = #tpu.pipeline_mode<synchronous>, transform_indices = @transform_2, window_bounds = array<i64: 1, 32>}, {transform_indices = @transform_3, window_bounds = array<i64: 128, 32>}]} {
    %c0 = arith.constant 0 : index
    %c0_0 = arith.constant 0 : index
    %0 = vector.load %arg1[%c0, %c0_0] : memref<128x48xf32, #tpu.memory_space<vmem>>, vector<128x48xf32>
    %c0_1 = arith.constant 0 : index
    %c0_2 = arith.constant 0 : index
    %1 = vector.load %arg2[%c0_1, %c0_2] : memref<48x32xf32, #tpu.memory_space<vmem>>, vector<48x32xf32>
    %cst = arith.constant dense<0.000000e+00> : vector<128x32xf32>
    %2 = tpu.matmul %0, %1, %cst {dimension_numbers = #tpu.dot_dimension_numbers<[1], [0], [0], [1], [0, 0, 1, 1], [], []>} : vector<128x48xf32>, vector<48x32xf32>, vector<128x32xf32> -> vector<128x32xf32>
    %c0_3 = arith.constant 0 : index
    %c0_4 = arith.constant 0 : index
    %3 = vector.load %arg3[%c0_3, %c0_4] : memref<1x32xf32, #tpu.memory_space<vmem>>, vector<1x32xf32>
    %4 = vector.broadcast %3 : vector<1x32xf32> to vector<128x32xf32>
    %5 = arith.addf %2, %4 : vector<128x32xf32>
    %cst_5 = arith.constant 0.000000e+00 : f32
    %6 = vector.broadcast %cst_5 : f32 to vector<128x32xf32>
    %7 = arith.maximumf %5, %6 : vector<128x32xf32>
    %8 = arith.truncf %7 : vector<128x32xf32> to vector<128x32xbf16>
    %c0_6 = arith.constant 0 : index
    %c0_7 = arith.constant 0 : index
    %9 = vector.load %arg4[%c0_6, %c0_7] : memref<128x32xbf16, #tpu.memory_space<vmem>>, vector<128x32xbf16>
    tpu.vector_store %arg4[%c0_6, %c0_7], %8 {strides = array<i32>} : memref<128x32xbf16, #tpu.memory_space<vmem>>, vector<128x32xbf16>,
    return
  }
  func.func @transform_0(%arg0: i32) -> (i32, i32) {
    %c0_i32 = arith.constant 0 : i32
    %c0_i32_0 = arith.constant 0 : i32
    return %arg0, %c0_i32 : i32, i32
  }
  func.func @transform_1(%arg0: i32) -> (i32, i32) {
    %c0_i32 = arith.constant 0 : i32
    %c0_i32_0 = arith.constant 0 : i32
    %c0_i32_1 = arith.constant 0 : i32
    return %c0_i32, %c0_i32_0 : i32, i32
  }
  func.func @transform_2(%arg0: i32) -> (i32, i32) {
    %c0_i32 = arith.constant 0 : i32
    %c0_i32_0 = arith.constant 0 : i32
    %c0_i32_1 = arith.constant 0 : i32
    return %c0_i32, %c0_i32_0 : i32, i32
  }
  func.func @transform_3(%arg0: i32) -> (i32, i32) {
    %c0_i32 = arith.constant 0 : i32
    %c0_i32_0 = arith.constant 0 : i32
    return %arg0, %c0_i32 : i32, i32
  }
}

module attributes {stable_mosaic.version = 11 : i64} {
  func.func @_scatter_kernel(%arg0: i32, %arg1: i32, %arg2: memref<128x32xbf16, #tpu.memory_space<vmem>>, %arg3: memref<1x128xi32, #tpu.memory_space<vmem>>, %arg4: memref<16x32xf32, #tpu.memory_space<vmem>>, %arg5: memref<32x32xf32, #tpu.memory_space<vmem>>, %arg6: memref<3x32xf32, #tpu.memory_space<vmem>>, %arg7: memref<16x32xf32, #tpu.memory_space<vmem>>, %arg8: memref<16x32xf32, #tpu.memory_space<vmem>>) attributes {dimension_semantics = [#tpu.dimension_semantics<parallel>, #tpu.dimension_semantics<arbitrary>], iteration_bounds = array<i64: 1, 1>, scalar_prefetch = 0 : i64, scratch_operands = 1 : i64, tpu.core_type = #tpu.core_type<tc>, window_params = [{transform_indices = @transform_0, window_bounds = array<i64: 128, 32>}, {transform_indices = @transform_1, window_bounds = array<i64: 1, 128>}, {transform_indices = @transform_2, window_bounds = array<i64: 16, 32>}, {pipeline_mode = #tpu.pipeline_mode<synchronous>, transform_indices = @transform_3, window_bounds = array<i64: 32, 32>}, {pipeline_mode = #tpu.pipeline_mode<synchronous>, transform_indices = @transform_4, window_bounds = array<i64: 3, 32>}, {transform_indices = @transform_5, window_bounds = array<i64: 16, 32>}]} {
    %c0_i32 = arith.constant 0 : i32
    %0 = arith.cmpi eq, %arg1, %c0_i32 : i32
    %1 = arith.extui %0 : i1 to i32
    %c0_i32_0 = arith.constant 0 : i32
    %2 = arith.cmpi ne, %1, %c0_i32_0 : i32
    scf.if %2 {
      %c0_10 = arith.constant 0 : index
      %c0_11 = arith.constant 0 : index
      %21 = vector.load %arg4[%c0_10, %c0_11] : memref<16x32xf32, #tpu.memory_space<vmem>>, vector<16x32xf32>
      %c0_12 = arith.constant 0 : index
      %c0_13 = arith.constant 0 : index
      %22 = vector.load %arg8[%c0_12, %c0_13] : memref<16x32xf32, #tpu.memory_space<vmem>>, vector<16x32xf32>
      tpu.vector_store %arg8[%c0_12, %c0_13], %21 {strides = array<i32>} : memref<16x32xf32, #tpu.memory_space<vmem>>, vector<16x32xf32>,
    } else {
    }
    %c16_i32 = arith.constant 16 : i32
    %3 = arith.muli %arg0, %c16_i32 : i32
    %4 = tpu.iota {dimensions = array<i32: 0>} : vector<16x128xi32>
    %5 = vector.broadcast %3 : i32 to vector<16x128xi32>
    %6 = arith.addi %5, %4 : vector<16x128xi32>
    %c0 = arith.constant 0 : index
    %c0_1 = arith.constant 0 : index
    %7 = vector.load %arg3[%c0, %c0_1] : memref<1x128xi32, #tpu.memory_space<vmem>>, vector<1x128xi32>
    %8 = vector.broadcast %7 : vector<1x128xi32> to vector<16x128xi32>
    %9 = arith.cmpi eq, %6, %8 : vector<16x128xi32>
    %10 = arith.extui %9 : vector<16x128xi1> to vector<16x128xi32>
    %11 = arith.sitofp %10 : vector<16x128xi32> to vector<16x128xf32>
    %12 = arith.truncf %11 : vector<16x128xf32> to vector<16x128xbf16>
    %c0_2 = arith.constant 0 : index
    %c0_3 = arith.constant 0 : index
    %13 = vector.load %arg8[%c0_2, %c0_3] : memref<16x32xf32, #tpu.memory_space<vmem>>, vector<16x32xf32>
    %c0_4 = arith.constant 0 : index
    %c0_5 = arith.constant 0 : index
    %14 = vector.load %arg2[%c0_4, %c0_5] : memref<128x32xbf16, #tpu.memory_space<vmem>>, vector<128x32xbf16>
    %cst = arith.constant dense<0.000000e+00> : vector<16x32xf32>
    %15 = tpu.matmul %12, %14, %cst {dimension_numbers = #tpu.dot_dimension_numbers<[1], [0], [0], [1], [0, 0, 1, 1], [], []>} : vector<16x128xbf16>, vector<128x32xbf16>, vector<16x32xf32> -> vector<16x32xf32>
    %16 = arith.addf %13, %15 : vector<16x32xf32>
    %c0_6 = arith.constant 0 : index
    %c0_7 = arith.constant 0 : index
    %17 = vector.load %arg8[%c0_6, %c0_7] : memref<16x32xf32, #tpu.memory_space<vmem>>, vector<16x32xf32>
    tpu.vector_store %arg8[%c0_6, %c0_7], %16 {strides = array<i32>} : memref<16x32xf32, #tpu.memory_space<vmem>>, vector<16x32xf32>,
    %c0_i32_8 = arith.constant 0 : i32
    %18 = arith.cmpi eq, %arg1, %c0_i32_8 : i32
    %19 = arith.extui %18 : i1 to i32
    %c0_i32_9 = arith.constant 0 : i32
    %20 = arith.cmpi ne, %19, %c0_i32_9 : i32
    scf.if %20 {
      %c0_10 = arith.constant 0 : index
      %c0_11 = arith.constant 0 : index
      %21 = vector.load %arg8[%c0_10, %c0_11] : memref<16x32xf32, #tpu.memory_space<vmem>>, vector<16x32xf32>
      %c0_12 = arith.constant 0 : index
      %c0_13 = arith.constant 0 : index
      %22 = vector.load %arg5[%c0_12, %c0_13] : memref<32x32xf32, #tpu.memory_space<vmem>>, vector<32x32xf32>
      %cst_14 = arith.constant dense<0.000000e+00> : vector<16x32xf32>
      %23 = tpu.matmul %21, %22, %cst_14 {dimension_numbers = #tpu.dot_dimension_numbers<[1], [0], [0], [1], [0, 0, 1, 1], [], []>} : vector<16x32xf32>, vector<32x32xf32>, vector<16x32xf32> -> vector<16x32xf32>
      %c0_15 = arith.constant 0 : index
      %c0_16 = arith.constant 0 : index
      %24 = vector.load %arg6[%c0_15, %c0_16] : memref<3x32xf32, #tpu.memory_space<vmem>>, vector<1x32xf32>
      %25 = vector.broadcast %24 : vector<1x32xf32> to vector<16x32xf32>
      %26 = arith.addf %23, %25 : vector<16x32xf32>
      %cst_17 = arith.constant dense<0.000000e+00> : vector<16xf32>
      %27 = vector.multi_reduction <add>, %26, %cst_17 [1] : vector<16x32xf32> to vector<16xf32>
      %28 = vector.shape_cast %27 : vector<16xf32> to vector<16x1xf32>
      %cst_18 = arith.constant 3.200000e+01 : f32
      %29 = vector.broadcast %cst_18 : f32 to vector<16x1xf32>
      %30 = arith.divf %28, %29 : vector<16x1xf32>
      %31 = vector.broadcast %30 : vector<16x1xf32> to vector<16x32xf32>
      %32 = arith.subf %26, %31 : vector<16x32xf32>
      %33 = arith.mulf %32, %32 : vector<16x32xf32>
      %cst_19 = arith.constant dense<0.000000e+00> : vector<16xf32>
      %34 = vector.multi_reduction <add>, %33, %cst_19 [1] : vector<16x32xf32> to vector<16xf32>
      %35 = vector.shape_cast %34 : vector<16xf32> to vector<16x1xf32>
      %cst_20 = arith.constant 3.200000e+01 : f32
      %36 = vector.broadcast %cst_20 : f32 to vector<16x1xf32>
      %37 = arith.divf %35, %36 : vector<16x1xf32>
      %38 = vector.broadcast %30 : vector<16x1xf32> to vector<16x32xf32>
      %39 = arith.subf %26, %38 : vector<16x32xf32>
      %cst_21 = arith.constant 9.99999974E-6 : f32
      %40 = vector.broadcast %cst_21 : f32 to vector<16x1xf32>
      %41 = arith.addf %37, %40 : vector<16x1xf32>
      %42 = math.rsqrt %41 : vector<16x1xf32>
      %43 = vector.broadcast %42 : vector<16x1xf32> to vector<16x32xf32>
      %44 = arith.mulf %39, %43 : vector<16x32xf32>
      %c1 = arith.constant 1 : index
      %c0_22 = arith.constant 0 : index
      %45 = vector.load %arg6[%c1, %c0_22] : memref<3x32xf32, #tpu.memory_space<vmem>>, vector<1x32xf32>
      %46 = vector.broadcast %45 : vector<1x32xf32> to vector<16x32xf32>
      %47 = arith.mulf %44, %46 : vector<16x32xf32>
      %c2 = arith.constant 2 : index
      %c0_23 = arith.constant 0 : index
      %48 = vector.load %arg6[%c2, %c0_23] : memref<3x32xf32, #tpu.memory_space<vmem>>, vector<1x32xf32>
      %49 = vector.broadcast %48 : vector<1x32xf32> to vector<16x32xf32>
      %50 = arith.addf %47, %49 : vector<16x32xf32>
      %cst_24 = arith.constant 0.000000e+00 : f32
      %51 = vector.broadcast %cst_24 : f32 to vector<16x32xf32>
      %52 = arith.maximumf %50, %51 : vector<16x32xf32>
      %c0_25 = arith.constant 0 : index
      %c0_26 = arith.constant 0 : index
      %53 = vector.load %arg7[%c0_25, %c0_26] : memref<16x32xf32, #tpu.memory_space<vmem>>, vector<16x32xf32>
      tpu.vector_store %arg7[%c0_25, %c0_26], %52 {strides = array<i32>} : memref<16x32xf32, #tpu.memory_space<vmem>>, vector<16x32xf32>,
    } else {
    }
    return
  }
  func.func @transform_0(%arg0: i32, %arg1: i32) -> (i32, i32) {
    %c0_i32 = arith.constant 0 : i32
    %c0_i32_0 = arith.constant 0 : i32
    return %arg1, %c0_i32 : i32, i32
  }
  func.func @transform_1(%arg0: i32, %arg1: i32) -> (i32, i32) {
    %c0_i32 = arith.constant 0 : i32
    %c0_i32_0 = arith.constant 0 : i32
    return %c0_i32, %arg1 : i32, i32
  }
  func.func @transform_2(%arg0: i32, %arg1: i32) -> (i32, i32) {
    %c0_i32 = arith.constant 0 : i32
    %c0_i32_0 = arith.constant 0 : i32
    return %arg0, %c0_i32 : i32, i32
  }
  func.func @transform_3(%arg0: i32, %arg1: i32) -> (i32, i32) {
    %c0_i32 = arith.constant 0 : i32
    %c0_i32_0 = arith.constant 0 : i32
    %c0_i32_1 = arith.constant 0 : i32
    return %c0_i32, %c0_i32_0 : i32, i32
  }
  func.func @transform_4(%arg0: i32, %arg1: i32) -> (i32, i32) {
    %c0_i32 = arith.constant 0 : i32
    %c0_i32_0 = arith.constant 0 : i32
    %c0_i32_1 = arith.constant 0 : i32
    return %c0_i32, %c0_i32_0 : i32, i32
  }
  func.func @transform_5(%arg0: i32, %arg1: i32) -> (i32, i32) {
    %c0_i32 = arith.constant 0 : i32
    %c0_i32_0 = arith.constant 0 : i32
    return %arg0, %c0_i32 : i32, i32
  }
}

</mosaic_0001>

<llo_original>
// kernel: tsar_layer_forward.3
$region0: #{tsar_layer_forward.3}
  #allocation0 [shape = 'u32[]', space=smem, size = 0x4, offset = 0x4, fixed_abs, tag = 'smem constant byte address 0x4 - core index']
  #allocation1 [shape = 'u32[72,128]{1,0:T(1,128)}', space=vmem, size = 0x9000, scoped, tag = 'internal scratch']
  #allocation2 [shape = 'f32[16,32]{1,0:T(8,128)}', space=vmem, size = 0x2000, scoped, tag = 'scratch operand']
  %s0 = inlined_call_operand.vmem [shape: bf16[128,32], index: 0, kind: input, shape index: {}]
  %s1 = inlined_call_operand.vmem [shape: s32[1,128], index: 1, kind: input, shape index: {}]
  %s2 = inlined_call_operand.hbm [shape: f32[16,32], index: 2, kind: input, shape index: {}, may-alias: {2,5}]
  %s3 = inlined_call_operand.vmem [shape: f32[32,32], index: 3, kind: input, shape index: {}]
  %s4 = inlined_call_operand.vmem [shape: f32[3,32], index: 4, kind: input, shape index: {}]
  %s5 = inlined_call_operand.hbm [shape: f32[16,32], index: 5, kind: output, shape index: {}, may-alias: {2,5}]
  %s6 = sld [smem:[#allocation0]]
  $region42: #{tsar_layer_forward.3} parent=0
    _
  %s8 = ssub.s32 1, %s6
  %s9 = scalar_select 0, %s8, %s6
  $region1: #{tsar_layer_forward.3} parent=0
    #allocation3 [shape = 'u8[8192]{0}', space=vmem, size = 0x2000, scoped, tag = 'input window, operand 2, single buffered']
    #allocation4 [shape = 's32[1]{0}', space=sflag, size = 0x4, scoped, tag = 'scoped memory for tsar_layer_forward.3']
    #allocation5 [shape = 's32[1]{0}', space=sflag, size = 0x4, scoped, tag = 'scoped memory for tsar_layer_forward.3']
    #allocation6 [shape = 'u8[8192]{0}', space=vmem, size = 0x2000, scoped, tag = 'output window, operand 0, single buffered']
    %10 = vsyncpa [#allocation4], 0
    %11 = vsyncpa [#allocation5], 0
    // Predicated region
    $region2: #{tsar_layer_forward.3} parent=1 // pred_check
      _
    $region3: #{tsar_layer_forward.3} parent=1 // pred_check_branch
      %13 = sbr.rel (0) target = $region5
    $region4: #{tsar_layer_forward.3} parent=1 // pred_region
      _
    $region5: #{tsar_layer_forward.3} parent=1 // pred_fallthru
      _
    // Predicated region
    $region6: #{tsar_layer_forward.3} parent=1 // pred_check
      _
    $region7: #{tsar_layer_forward.3} parent=1 // pred_check_branch
      %15 = sbr.rel (0) target = $region9
    $region8: #{tsar_layer_forward.3} parent=1 // pred_region
      _
    $region9: #{tsar_layer_forward.3} parent=1 // pred_fallthru
      _
    // Predicated region
    $region10: #{tsar_layer_forward.3} parent=1 // pred_check
      _
    $region11: #{tsar_layer_forward.3} parent=1 // pred_check_branch
      %17 = sbr.rel (0) target = $region13
    $region12: #{tsar_layer_forward.3} parent=1 // pred_region
      %19 = vsyncadd [#allocation4], 0
      %s20 = sshll.u32 %s2, 4
      %s21 = int_to_ptr.hbm [resolvable:$true] %s20
      %s22 = sshll.u32 [#allocation3], 4
      %s23 = int_to_ptr.vmem [resolvable:$true] %s22
      %28 = dma.hbm_to_vmem [thread:$0]  %s21, 256, %s23, [#allocation4], 128, 128, 8
    $region13: #{tsar_layer_forward.3} parent=1 // pred_fallthru
      _
    // Predicated region
    $region14: #{tsar_layer_forward.3} parent=1 // pred_check
      _
    $region15: #{tsar_layer_forward.3} parent=1 // pred_check_branch
      %30 = sbr.rel (0) target = $region17
    $region16: #{tsar_layer_forward.3} parent=1 // pred_region
      _
    $region17: #{tsar_layer_forward.3} parent=1 // pred_fallthru
      _
    // Predicated region
    $region18: #{tsar_layer_forward.3} parent=1 // pred_check
      _
    $region19: #{tsar_layer_forward.3} parent=1 // pred_check_branch
      %32 = sbr.rel (0) target = $region21
    $region20: #{tsar_layer_forward.3} parent=1 // pred_region
      _
    $region21: #{tsar_layer_forward.3} parent=1 // pred_fallthru
      _
    // Predicated region
    $region22: #{tsar_layer_forward.3} parent=1 // pred_check
      _
    $region23: #{tsar_layer_forward.3} parent=1 // pred_check_branch
      %34 = sbr.rel (0) target = $region25
    $region24: #{tsar_layer_forward.3} parent=1 // pred_region
      %36 = dma.done [#allocation4], 256
    $region25: #{tsar_layer_forward.3} parent=1 // pred_fallthru
      _
    %p37 = scmp.eq.s32.totalorder 0, 0
    // Predicated region
    $region26: #{tsar_layer_forward.3} parent=1 // pred_check
      %p38 = pneg %p37
    $region27: #{tsar_layer_forward.3} parent=1 // pred_check_branch
      %40 = sbr.rel (%p38) target = $region29
    $region28: #{tsar_layer_forward.3} parent=1 // pred_region
      %v41 = vld [vmem:[#allocation3] sm:$0xff]
      %v42 = vld [vmem:[#allocation3 + $0x8] sm:$0xff]
      %vm43 = vcmask 261120
      %44 = vst.msk [vmem:[#allocation2] sm:$0xff] %vm43, %v41
      %45 = vst.msk [vmem:[#allocation2 + $0x8] sm:$0xff] %vm43, %v42
    $region29: #{tsar_layer_forward.3} parent=1 // pred_fallthru
      _
    %s46 = smul.u32 0, 16
    %v47 = vlaneseq
    %v48 = vshrl.u32 %v47, 7
    %v49 = vadd.s32 %v48, 8
    %v50 = vstv %s46
    %v51 = vadd.s32 %v50, %v48
    %v52 = vadd.s32 %v50, %v49
    %v53 = vld [vmem:[%s1] sm:$0x1]
    %v54 = vperm.slane %v53, 0
    %vm55 = vcmp.eq.s32.totalorder %v51, %v54
    %vm56 = vcmp.eq.s32.totalorder %v52, %v54
    %v57 = vsel %vm55, 1, 0
    %v58 = vsel %vm56, 1, 0
    %v59 = vcvt.s32.f32 %v57
    %v60 = vcvt.s32.f32 %v58
    %v61 = vpack.c.bf16 %v60, %v59
    %v62 = vld [vmem:[#allocation2] sm:$0xff]
    %v63 = vld [vmem:[#allocation2 + $0x8] sm:$0xff]
    %v64 = vld [vmem:[%s0] sm:$0xf]
    %v65 = vld [vmem:[%s0 + $0x4] sm:$0xf]
    %v66 = vld [vmem:[%s0 + $0x8] sm:$0xf]
    %v67 = vld [vmem:[%s0 + $0xc] sm:$0xf]
    %v68 = vld [vmem:[%s0 + $0x10] sm:$0xf]
    %v69 = vld [vmem:[%s0 + $0x14] sm:$0xf]
    %v70 = vld [vmem:[%s0 + $0x18] sm:$0xf]
    %v71 = vld [vmem:[%s0 + $0x1c] sm:$0xf]
    %v72 = vld [vmem:[%s0 + $0x20] sm:$0xf]
    %v73 = vld [vmem:[%s0 + $0x24] sm:$0xf]
    %v74 = vld [vmem:[%s0 + $0x28] sm:$0xf]
    %v75 = vld [vmem:[%s0 + $0x2c] sm:$0xf]
    %v76 = vld [vmem:[%s0 + $0x30] sm:$0xf]
    %v77 = vld [vmem:[%s0 + $0x34] sm:$0xf]
    %v78 = vld [vmem:[%s0 + $0x38] sm:$0xf]
    %v79 = vld [vmem:[%s0 + $0x3c] sm:$0xf]
    %v96 = vunpack.c.l.b16 %v64
    %v97 = vunpack.c.l.b16 %v65
    %v98 = vunpack.c.l.b16 %v66
    %v99 = vunpack.c.l.b16 %v67
    %v100 = vunpack.c.l.b16 %v68
    %v101 = vunpack.c.l.b16 %v69
    %v102 = vunpack.c.l.b16 %v70
    %v103 = vunpack.c.l.b16 %v71
    %v104 = vunpack.c.l.b16 %v72
    %v105 = vunpack.c.l.b16 %v73
    %v106 = vunpack.c.l.b16 %v74
    %v107 = vunpack.c.l.b16 %v75
    %v108 = vunpack.c.l.b16 %v76
    %v109 = vunpack.c.l.b16 %v77
    %v110 = vunpack.c.l.b16 %v78
    %v111 = vunpack.c.l.b16 %v79
    %v112 = vpack.c.b16 %v97, %v96
    %v113 = vpack.c.b16 %v99, %v98
    %v114 = vpack.c.b16 %v101, %v100
    %v115 = vpack.c.b16 %v103, %v102
    %v116 = vpack.c.b16 %v105, %v104
    %v117 = vpack.c.b16 %v107, %v106
    %v118 = vpack.c.b16 %v109, %v108
    %v119 = vpack.c.b16 %v111, %v110
    %128 = vmatpush.bf16.msra.mxu0 %v119
    %129 = vmatpush.bf16.msra.mxu0 %v118
    %130 = vmatpush.bf16.msra.mxu0 %v117
    %131 = vmatpush.bf16.msra.mxu0 %v116
    %132 = vmatpush.bf16.msra.mxu0 %v115
    %133 = vmatpush.bf16.msra.mxu0 %v114
    %134 = vmatpush.bf16.msra.mxu0 %v113
    %135 = vmatpush.bf16.msra.mxu0 %v112
    %136 = vmatmul.bf16.gmra.mxu0 %v61
    %v137 = vpop.f32.mrf.mxu0
    %v138 = vadd.f32 0.0, %v137
    %v139 = vpop.f32.mrf.mxu0
    %v140 = vadd.f32 0.0, %v139
    %141 = vdwg.mxu0
    %v142 = vadd.f32 %v62, %v138
    %v143 = vadd.f32 %v63, %v140
    %vm144 = vcmask 261120
    %145 = vst.msk [vmem:[#allocation2] sm:$0xff] %vm144, %v142
    %146 = vst.msk [vmem:[#allocation2 + $0x8] sm:$0xff] %vm144, %v143
    // Predicated region
    $region30: #{tsar_layer_forward.3} parent=1 // pred_check
      %p147 = pneg %p37
    $region31: #{tsar_layer_forward.3} parent=1 // pred_check_branch
      %149 = sbr.rel (%p147) target = $region33
    $region32: #{tsar_layer_forward.3} parent=1 // pred_region
      %v150 = vld [vmem:[#allocation2] sm:$0xff]
      %v151 = vld [vmem:[#allocation2 + $0x8] sm:$0xff]
      %v152 = vld [vmem:[%s3] sm:$0xff]
      %v153 = vld [vmem:[%s3 + $0x8] sm:$0xff]
      %v154 = vld [vmem:[%s3 + $0x10] sm:$0xff]
      %v155 = vld [vmem:[%s3 + $0x18] sm:$0xff]
      %v156 = vld [vmem:[%s4] sm:$0x1]
      %v157 = vperm.slane %v156, 0
      %v159 = vsel %vm144, %v150, 0
      %v162 = vsel %vm144, %v151, 0
      %164 = vmatpush.msra.mxu0 0.0
      %165 = vmatpush.msra.mxu0 0.0
      %166 = vmatpush.msra.mxu0 0.0
      %167 = vmatpush.msra.mxu0 0.0
      %168 = vmatpush.msra.mxu0 0.0
      %169 = vmatpush.msra.mxu0 0.0
      %170 = vmatpush.msra.mxu0 0.0
      %171 = vmatpush.msra.mxu0 0.0
      %172 = vmatpush.msra.mxu0 0.0
      %173 = vmatpush.msra.mxu0 0.0
      %174 = vmatpush.msra.mxu0 0.0
      %175 = vmatpush.msra.mxu0 0.0
      %176 = vmatpush.msra.mxu0 %v155
      %177 = vmatpush.msra.mxu0 %v154
      %178 = vmatpush.msra.mxu0 %v153
      %179 = vmatpush.msra.mxu0 %v152
      %180 = vmatmul.f32.gmra.mxu0 %v159
      %v181 = vpop.f32.mrf.mxu0
      %v182 = vadd.f32 %v157, %v181
      %183 = vmatmul.f32.gmra.mxu0 %v162
      %v184 = vpop.f32.mrf.mxu0
      %v185 = vadd.f32 %v157, %v184
      %186 = vdwg.mxu0
      %v187 = vsel %vm144, %v182, 0.0
      %188 = vadd.xlane.f32.xlu0 %v187
      %v189 = vpop.xlane.xlu0 %188
      %v190 = vsel %vm144, %v185, 0.0
      %191 = vadd.xlane.f32.xlu0 %v190
      %v192 = vpop.xlane.xlu0 %191
      %v193 = vrcp.pop 32.0
      %v194 = vmul.f32 32.0, %v193
      %v195 = vsub.f32 1.0, %v194
      %v196 = vmul.f32 %v193, %v195
      %v197 = vadd.f32 %v193, %v196
      %vm198 = vweird.f32 %v193
      %v199 = vsel %vm198, %v193, %v197
      %v200 = vmul.f32 %v189, %v199
      %v201 = vmul.f32 %v192, %v199
      %v202 = vsub.f32 %v182, %v200
      %v203 = vsub.f32 %v185, %v201
      %v204 = vmul.f32 %v202, %v202
      %v205 = vmul.f32 %v203, %v203
      %v206 = vsel %vm144, %v204, 0.0
      %207 = vadd.xlane.f32.xlu0 %v206
      %v208 = vpop.xlane.xlu0 %207
      %v209 = vsel %vm144, %v205, 0.0
      %210 = vadd.xlane.f32.xlu0 %v209
      %v211 = vpop.xlane.xlu0 %210
      %v212 = vmul.f32 %v208, %v199
      %v213 = vmul.f32 %v211, %v199
      %v214 = vadd.f32 %v212, 1e-05
      %v215 = vadd.f32 %v213, 1e-05
      %v216 = vrsqrt.pop %v214
      %v217 = vmul.f32 %v216, %v214
      %v218 = vmul.f32 %v217, %v216
      %v219 = vmul.f32 0.5, %v218
      %v220 = vsub.f32 1.5, %v219
      %v221 = vmul.f32 %v216, %v220
      %vm222 = vweird.f32 %v214
      %vm223 = vweird.f32 %v216
      %vm224 = vmor %vm222, %vm223
      %v225 = vsel %vm224, %v216, %v221
      %v226 = vrsqrt.pop %v215
      %v227 = vmul.f32 %v226, %v215
      %v228 = vmul.f32 %v227, %v226
      %v229 = vmul.f32 0.5, %v228
      %v230 = vsub.f32 1.5, %v229
      %v231 = vmul.f32 %v226, %v230
      %vm232 = vweird.f32 %v215
      %vm233 = vweird.f32 %v226
      %vm234 = vmor %vm232, %vm233
      %v235 = vsel %vm234, %v226, %v231
      %v236 = vmul.f32 %v202, %v225
      %v237 = vmul.f32 %v203, %v235
      %v238 = vld [vmem:[%s4 + $0x1] sm:$0x1]
      %v239 = vperm.slane %v238, 0
      %v240 = vmul.f32 %v236, %v239
      %v241 = vmul.f32 %v237, %v239
      %v242 = vld [vmem:[%s4 + $0x2] sm:$0x1]
      %v243 = vperm.slane %v242, 0
      %v244 = vadd.f32 %v240, %v243
      %v245 = vadd.f32 %v241, %v243
      %v246 = vmax.f32 %v244, 0.0
      %v247 = vmax.f32 %v245, 0.0
      %248 = vst.msk [vmem:[#allocation6] sm:$0xff] %vm144, %v246
      %249 = vst.msk [vmem:[#allocation6 + $0x8] sm:$0xff] %vm144, %v247
    $region33: #{tsar_layer_forward.3} parent=1 // pred_fallthru
      _
    // Predicated region
    $region34: #{tsar_layer_forward.3} parent=1 // pred_check
      _
    $region35: #{tsar_layer_forward.3} parent=1 // pred_check_branch
      %251 = sbr.rel (0) target = $region37
    $region36: #{tsar_layer_forward.3} parent=1 // pred_region
      %253 = vsyncadd [#allocation5], 0
      %s254 = sshll.u32 [#allocation6], 4
      %s255 = int_to_ptr.vmem [resolvable:$true] %s254
      %s256 = sshll.u32 %s5, 4
      %s257 = int_to_ptr.hbm [resolvable:$true] %s256
      %262 = dma.vmem_to_hbm [thread:$0]  %s255, 256, %s257, [#allocation5], 128, 128, 8
    $region37: #{tsar_layer_forward.3} parent=1 // pred_fallthru
      _
    // Predicated region
    $region38: #{tsar_layer_forward.3} parent=1 // pred_check
      _
    $region39: #{tsar_layer_forward.3} parent=1 // pred_check_branch
      %264 = sbr.rel (0) target = $region41
    $region40: #{tsar_layer_forward.3} parent=1 // pred_region
      %266 = dma.done [#allocation5], 256
    $region41: #{tsar_layer_forward.3} parent=1 // pred_fallthru
      _
    %267 = vsyncpa [#allocation4], 1
    %268 = vsyncpa [#allocation5], 1

// kernel: tsar_layer_forward.2
$region0: #{tsar_layer_forward.2}
  #allocation0 [shape = 'u32[]', space=smem, size = 0x4, offset = 0x4, fixed_abs, tag = 'smem constant byte address 0x4 - core index']
  #allocation1 [shape = 'u32[72,128]{1,0:T(1,128)}', space=vmem, size = 0x9000, scoped, tag = 'internal scratch']
  %s0 = inlined_call_operand.vmem [shape: f32[128,48], index: 0, kind: input, shape index: {}]
  %s1 = inlined_call_operand.vmem [shape: f32[48,32], index: 1, kind: input, shape index: {}]
  %s2 = inlined_call_operand.vmem [shape: f32[1,32], index: 2, kind: input, shape index: {}]
  %s3 = inlined_call_operand.vmem [shape: bf16[128,32], index: 3, kind: output, shape index: {}]
  %s4 = sld [smem:[#allocation0]]
  $region22: #{tsar_layer_forward.2} parent=0
    _
  %s6 = ssub.s32 1, %s4
  %s7 = scalar_select 0, %s6, %s4
  // Predicated region
  $region2: #{tsar_layer_forward.2} parent=0 // pred_check
    _
  $region3: #{tsar_layer_forward.2} parent=0 // pred_check_branch
    %9 = sbr.rel (0) target = $region5
  $region4: #{tsar_layer_forward.2} parent=0 // pred_region
    _
  $region5: #{tsar_layer_forward.2} parent=0 // pred_fallthru
    _
  // Predicated region
  $region6: #{tsar_layer_forward.2} parent=0 // pred_check
    _
  $region7: #{tsar_layer_forward.2} parent=0 // pred_check_branch
    %11 = sbr.rel (0) target = $region9
  $region8: #{tsar_layer_forward.2} parent=0 // pred_region
    _
  $region9: #{tsar_layer_forward.2} parent=0 // pred_fallthru
    _
  // Predicated region
  $region10: #{tsar_layer_forward.2} parent=0 // pred_check
    _
  $region11: #{tsar_layer_forward.2} parent=0 // pred_check_branch
    %13 = sbr.rel (0) target = $region13
  $region12: #{tsar_layer_forward.2} parent=0 // pred_region
    _
  $region13: #{tsar_layer_forward.2} parent=0 // pred_fallthru
    _
  %v14 = vld [vmem:[%s0] sm:$0xff]
  %v15 = vld [vmem:[%s0 + $0x8] sm:$0xff]
  %v16 = vld [vmem:[%s0 + $0x10] sm:$0xff]
  %v17 = vld [vmem:[%s0 + $0x18] sm:$0xff]
  %v18 = vld [vmem:[%s0 + $0x20] sm:$0xff]
  %v19 = vld [vmem:[%s0 + $0x28] sm:$0xff]
  %v20 = vld [vmem:[%s0 + $0x30] sm:$0xff]
  %v21 = vld [vmem:[%s0 + $0x38] sm:$0xff]
  %v22 = vld [vmem:[%s0 + $0x40] sm:$0xff]
  %v23 = vld [vmem:[%s0 + $0x48] sm:$0xff]
  %v24 = vld [vmem:[%s0 + $0x50] sm:$0xff]
  %v25 = vld [vmem:[%s0 + $0x58] sm:$0xff]
  %v26 = vld [vmem:[%s0 + $0x60] sm:$0xff]
  %v27 = vld [vmem:[%s0 + $0x68] sm:$0xff]
  %v28 = vld [vmem:[%s0 + $0x70] sm:$0xff]
  %v29 = vld [vmem:[%s0 + $0x78] sm:$0xff]
  %v30 = vld [vmem:[%s1] sm:$0xff]
  %v31 = vld [vmem:[%s1 + $0x8] sm:$0xff]
  %v32 = vld [vmem:[%s1 + $0x10] sm:$0xff]
  %v33 = vld [vmem:[%s1 + $0x18] sm:$0xff]
  %v34 = vld [vmem:[%s1 + $0x20] sm:$0xff]
  %v35 = vld [vmem:[%s1 + $0x28] sm:$0xff]
  %v36 = vld [vmem:[%s2] sm:$0x1]
  %v38 = vperm.slane %v36, 0
  %vm40 = vcmask 392192
  %v42 = vsel %vm40, %v14, 0
  %v45 = vsel %vm40, %v15, 0
  %v48 = vsel %vm40, %v16, 0
  %v51 = vsel %vm40, %v17, 0
  %v54 = vsel %vm40, %v18, 0
  %v57 = vsel %vm40, %v19, 0
  %v60 = vsel %vm40, %v20, 0
  %v63 = vsel %vm40, %v21, 0
  %v66 = vsel %vm40, %v22, 0
  %v69 = vsel %vm40, %v23, 0
  %v72 = vsel %vm40, %v24, 0
  %v75 = vsel %vm40, %v25, 0
  %v78 = vsel %vm40, %v26, 0
  %v81 = vsel %vm40, %v27, 0
  %v84 = vsel %vm40, %v28, 0
  %v87 = vsel %vm40, %v29, 0
  %89 = vmatpush.msra.mxu0 0.0
  %90 = vmatpush.msra.mxu0 0.0
  %91 = vmatpush.msra.mxu0 0.0
  %92 = vmatpush.msra.mxu0 0.0
  %93 = vmatpush.msra.mxu0 0.0
  %94 = vmatpush.msra.mxu0 0.0
  %95 = vmatpush.msra.mxu0 0.0
  %96 = vmatpush.msra.mxu0 0.0
  %97 = vmatpush.msra.mxu0 0.0
  %98 = vmatpush.msra.mxu0 0.0
  %99 = vmatpush.msra.mxu0 %v35
  %100 = vmatpush.msra.mxu0 %v34
  %101 = vmatpush.msra.mxu0 %v33
  %102 = vmatpush.msra.mxu0 %v32
  %103 = vmatpush.msra.mxu0 %v31
  %104 = vmatpush.msra.mxu0 %v30
  %105 = vmatmul.f32.gmra.mxu0 %v42
  %v106 = vpop.f32.mrf.mxu0
  %v107 = vadd.f32 %v38, %v106
  %108 = vmatmul.f32.gmra.mxu0 %v45
  %v109 = vpop.f32.mrf.mxu0
  %v110 = vadd.f32 %v38, %v109
  %111 = vmatmul.f32.gmra.mxu0 %v48
  %v112 = vpop.f32.mrf.mxu0
  %v113 = vadd.f32 %v38, %v112
  %114 = vmatmul.f32.gmra.mxu0 %v51
  %v115 = vpop.f32.mrf.mxu0
  %v116 = vadd.f32 %v38, %v115
  %117 = vmatmul.f32.gmra.mxu0 %v54
  %v118 = vpop.f32.mrf.mxu0
  %v119 = vadd.f32 %v38, %v118
  %120 = vmatmul.f32.gmra.mxu0 %v57
  %v121 = vpop.f32.mrf.mxu0
  %v122 = vadd.f32 %v38, %v121
  %123 = vmatmul.f32.gmra.mxu0 %v60
  %v124 = vpop.f32.mrf.mxu0
  %v125 = vadd.f32 %v38, %v124
  %126 = vmatmul.f32.gmra.mxu0 %v63
  %v127 = vpop.f32.mrf.mxu0
  %v128 = vadd.f32 %v38, %v127
  %129 = vmatmul.f32.gmra.mxu0 %v66
  %v130 = vpop.f32.mrf.mxu0
  %v131 = vadd.f32 %v38, %v130
  %132 = vmatmul.f32.gmra.mxu0 %v69
  %v133 = vpop.f32.mrf.mxu0
  %v134 = vadd.f32 %v38, %v133
  %135 = vmatmul.f32.gmra.mxu0 %v72
  %v136 = vpop.f32.mrf.mxu0
  %v137 = vadd.f32 %v38, %v136
  %138 = vmatmul.f32.gmra.mxu0 %v75
  %v139 = vpop.f32.mrf.mxu0
  %v140 = vadd.f32 %v38, %v139
  %141 = vmatmul.f32.gmra.mxu0 %v78
  %v142 = vpop.f32.mrf.mxu0
  %v143 = vadd.f32 %v38, %v142
  %144 = vmatmul.f32.gmra.mxu0 %v81
  %v145 = vpop.f32.mrf.mxu0
  %v146 = vadd.f32 %v38, %v145
  %147 = vmatmul.f32.gmra.mxu0 %v84
  %v148 = vpop.f32.mrf.mxu0
  %v149 = vadd.f32 %v38, %v148
  %150 = vmatmul.f32.gmra.mxu0 %v87
  %v151 = vpop.f32.mrf.mxu0
  %v152 = vadd.f32 %v38, %v151
  %153 = vdwg.mxu0
  %v154 = vmax.f32 %v107, 0.0
  %v155 = vmax.f32 %v110, 0.0
  %v156 = vmax.f32 %v113, 0.0
  %v157 = vmax.f32 %v116, 0.0
  %v158 = vmax.f32 %v119, 0.0
  %v159 = vmax.f32 %v122, 0.0
  %v160 = vmax.f32 %v125, 0.0
  %v161 = vmax.f32 %v128, 0.0
  %v162 = vmax.f32 %v131, 0.0
  %v163 = vmax.f32 %v134, 0.0
  %v164 = vmax.f32 %v137, 0.0
  %v165 = vmax.f32 %v140, 0.0
  %v166 = vmax.f32 %v143, 0.0
  %v167 = vmax.f32 %v146, 0.0
  %v168 = vmax.f32 %v149, 0.0
  %v169 = vmax.f32 %v152, 0.0
  %v170 = vpack.c.bf16 %v154, %v154
  %v171 = vpack.c.bf16 %v155, %v155
  %v172 = vpack.c.bf16 %v156, %v156
  %v173 = vpack.c.bf16 %v157, %v157
  %v174 = vpack.c.bf16 %v158, %v158
  %v175 = vpack.c.bf16 %v159, %v159
  %v176 = vpack.c.bf16 %v160, %v160
  %v177 = vpack.c.bf16 %v161, %v161
  %v178 = vpack.c.bf16 %v162, %v162
  %v179 = vpack.c.bf16 %v163, %v163
  %v180 = vpack.c.bf16 %v164, %v164
  %v181 = vpack.c.bf16 %v165, %v165
  %v182 = vpack.c.bf16 %v166, %v166
  %v183 = vpack.c.bf16 %v167, %v167
  %v184 = vpack.c.bf16 %v168, %v168
  %v185 = vpack.c.bf16 %v169, %v169
  %vm186 = vcmask 257024
  %187 = vst.msk [vmem:[%s3] sm:$0xf] %vm186, %v170
  %188 = vst.msk [vmem:[%s3 + $0x4] sm:$0xf] %vm186, %v171
  %189 = vst.msk [vmem:[%s3 + $0x8] sm:$0xf] %vm186, %v172
  %190 = vst.msk [vmem:[%s3 + $0xc] sm:$0xf] %vm186, %v173
  %191 = vst.msk [vmem:[%s3 + $0x10] sm:$0xf] %vm186, %v174
  %192 = vst.msk [vmem:[%s3 + $0x14] sm:$0xf] %vm186, %v175
  %193 = vst.msk [vmem:[%s3 + $0x18] sm:$0xf] %vm186, %v176
  %194 = vst.msk [vmem:[%s3 + $0x1c] sm:$0xf] %vm186, %v177
  %195 = vst.msk [vmem:[%s3 + $0x20] sm:$0xf] %vm186, %v178
  %196 = vst.msk [vmem:[%s3 + $0x24] sm:$0xf] %vm186, %v179
  %197 = vst.msk [vmem:[%s3 + $0x28] sm:$0xf] %vm186, %v180
  %198 = vst.msk [vmem:[%s3 + $0x2c] sm:$0xf] %vm186, %v181
  %199 = vst.msk [vmem:[%s3 + $0x30] sm:$0xf] %vm186, %v182
  %200 = vst.msk [vmem:[%s3 + $0x34] sm:$0xf] %vm186, %v183
  %201 = vst.msk [vmem:[%s3 + $0x38] sm:$0xf] %vm186, %v184
  %202 = vst.msk [vmem:[%s3 + $0x3c] sm:$0xf] %vm186, %v185
  // Predicated region
  $region14: #{tsar_layer_forward.2} parent=0 // pred_check
    _
  $region15: #{tsar_layer_forward.2} parent=0 // pred_check_branch
    %204 = sbr.rel (0) target = $region17
  $region16: #{tsar_layer_forward.2} parent=0 // pred_region
    _
  $region17: #{tsar_layer_forward.2} parent=0 // pred_fallthru
    _
  // Predicated region
  $region18: #{tsar_layer_forward.2} parent=0 // pred_check
    _
  $region19: #{tsar_layer_forward.2} parent=0 // pred_check_branch
    %206 = sbr.rel (0) target = $region21
  $region20: #{tsar_layer_forward.2} parent=0 // pred_region
    _
  $region21: #{tsar_layer_forward.2} parent=0 // pred_fallthru
    _

</llo_original>
